<compile_context>
chip_gen: v5e
topology: v5e:2x2
jax: 0.10.0
libtpu: 0.0.40
codegen_flags: <defaults>
</compile_context>

<pallas_src>
import math

import jax
import jax.numpy as jnp
from jax import lax
from jax.experimental import pallas as pl
from jax.experimental.pallas import tpu as pltpu


def _round_up(x, m):
    return ((x + m - 1) // m) * m


def _normhead_kernel(x_ref, w_ref, inv_ref, o_ref, acc_ref):
    # x_ref:   (tile_m, tile_k)  token tile, native dtype
    # w_ref:   (tile_n, tile_k)  vocab-row tile, native dtype
    # inv_ref: (1, tile_n)       f32 reciprocal row norms
    # o_ref:   (tile_m, tile_n)  output tile
    # acc_ref: (tile_m, tile_n)  f32 accumulator, persists across the K axis
    @pl.when(pl.program_id(2) == 0)
    def _init():
        acc_ref[...] = jnp.zeros_like(acc_ref)

    x = x_ref[...]
    w = w_ref[...]
    # f32 inputs need full-precision MXU passes; bf16 is native single-pass.
    precision = (
        lax.Precision.HIGHEST
        if (x.dtype == jnp.float32 and w.dtype == jnp.float32)
        else None
    )
    # Contract last dim of x with last dim of w -> (tile_m, tile_n); no transpose.
    acc_ref[...] += lax.dot_general(
        x,
        w,
        dimension_numbers=(((1,), (1,)), ((), ())),
        preferred_element_type=jnp.float32,
        precision=precision,
    )

    @pl.when(pl.program_id(2) == pl.num_programs(2) - 1)
    def _finalize():
        # Fold the row normalization into a cheap (tile_m, tile_n) VPU scale.
        o_ref[...] = (acc_ref[...] * inv_ref[...]).astype(o_ref.dtype)


def normhead_forward(hidden_states, weight, *, tile_m=None, tile_n=512, tile_k=None):
    """hidden_states: (..., H), weight: (V, H) -> (..., V)."""
    orig_shape = hidden_states.shape
    H = orig_shape[-1]
    V, Hw = weight.shape
    assert Hw == H, "weight last dim must match hidden size"

    x = hidden_states.reshape(-1, H)
    M = x.shape[0]
    out_dtype = hidden_states.dtype

    # --- reciprocal row-norm pre-pass (reads W once; applied inside the kernel).
    w_f32 = weight.astype(jnp.float32)
    inv_norm = 1.0 / jnp.maximum(jnp.sqrt(jnp.sum(w_f32 * w_f32, axis=1)), 1e-12)

    # --- tile selection -------------------------------------------------------
    if tile_m is None:
        tile_m = min(512, _round_up(M, 8))
    if tile_k is None:
        tile_k = H if H <= 4096 else 2048  # K-tile only for large hidden sizes
    tile_n = min(tile_n, _round_up(V, 128))

    Mp = _round_up(M, tile_m)
    Vp = _round_up(V, tile_n)
    Kp = _round_up(H, tile_k)

    x_p = x if (Mp == M and Kp == H) else jnp.pad(x, ((0, Mp - M), (0, Kp - H)))
    w_p = weight if (Vp == V and Kp == H) else jnp.pad(weight, ((0, Vp - V), (0, Kp - H)))
    inv_p = inv_norm if Vp == V else jnp.pad(inv_norm, (0, Vp - V))
    inv_p = inv_p.reshape(1, Vp)

    num_m, num_n, num_k = Mp // tile_m, Vp // tile_n, Kp // tile_k

    # --- explicit VMEM budget: double-buffered ins/outs + f32 accumulator + slack.
    xb = x_p.dtype.itemsize
    wb = w_p.dtype.itemsize
    ob = jnp.dtype(out_dtype).itemsize
    vmem_bytes = (
        2 * (tile_m * tile_k * xb + tile_n * tile_k * wb + tile_n * 4)
        + 2 * tile_m * tile_n * ob
        + tile_m * tile_n * 4
        + (8 << 20)
    )
    vmem_bytes = int(min(vmem_bytes, 100 * 1024 * 1024))

    out = pl.pallas_call(
        _normhead_kernel,
        out_shape=jax.ShapeDtypeStruct((Mp, Vp), out_dtype),
        grid_spec=pltpu.PrefetchScalarGridSpec(
            num_scalar_prefetch=0,
            grid=(num_m, num_n, num_k),
            in_specs=[
                pl.BlockSpec((tile_m, tile_k), lambda i, j, k: (i, k)),  # x
                pl.BlockSpec((tile_n, tile_k), lambda i, j, k: (j, k)),  # weight
                pl.BlockSpec((1, tile_n), lambda i, j, k: (0, j)),       # 1/||w||
            ],
            out_specs=pl.BlockSpec((tile_m, tile_n), lambda i, j, k: (i, j)),
            scratch_shapes=[pltpu.VMEM((tile_m, tile_n), jnp.float32)],
        ),
        compiler_params=pltpu.CompilerParams(
            dimension_semantics=("parallel", "parallel", "arbitrary"),
            vmem_limit_bytes=vmem_bytes,
        ),
    )(x_p, w_p, inv_p)

    out = out[:M, :V]
    return out.reshape(*orig_shape[:-1], V)


def init_normhead_weight(key, vocab_size, hidden_size, dtype=jnp.float32):
    # kaiming_uniform_(a=sqrt(5)) on (V, H) => bound = 1/sqrt(fan_in) = 1/sqrt(H)
    bound = 1.0 / math.sqrt(hidden_size)
    return jax.random.uniform(
        key, (vocab_size, hidden_size), dtype=dtype, minval=-bound, maxval=bound
    )


def normhead_reference(hidden_states, weight):
    w = weight.astype(jnp.float32)
    norm = jnp.maximum(jnp.sqrt(jnp.sum(w * w, axis=1, keepdims=True)), 1e-12)
    w_n = w / norm
    return jnp.einsum(
        "...h,vh->...v",
        hidden_states.astype(jnp.float32),
        w_n,
        precision=lax.Precision.HIGHEST,
    ).astype(hidden_states.dtype)


# TODO(synk): the PyTorch module's `first_flag` in-place Parameter re-normalization is
# stateful caching only; the forward math is identical, so the kernel always normalizes.

if __name__ == "__main__":
    batch, seq, hidden, vocab = 2, 8, 32, 256

    key = jax.random.PRNGKey(0)
    k_x, k_w = jax.random.split(key)

    hidden_states = jax.random.normal(k_x, (batch, seq, hidden), dtype=jnp.float32)
    weight = init_normhead_weight(k_w, vocab, hidden, dtype=jnp.float32)

    fwd = jax.jit(normhead_forward)
    out = jax.block_until_ready(fwd(hidden_states, weight))

    ref = normhead_reference(hidden_states, weight)
    assert out.shape == (batch, seq, vocab)
    assert jnp.allclose(out, ref, atol=1e-4, rtol=1e-4), (
        f"mismatch vs reference, max abs err = {jnp.max(jnp.abs(out - ref))}"
    )

    print("KERNEL_OK")
</pallas_src>

<mosaic_0001>
module attributes {stable_mosaic.version = 11 : i64} {
  func.func @_normhead_kernel(%arg0: i32, %arg1: i32, %arg2: i32, %arg3: memref<16x32xf32, #tpu.memory_space<vmem>>, %arg4: memref<256x32xf32, #tpu.memory_space<vmem>>, %arg5: memref<1x256xf32, #tpu.memory_space<vmem>>, %arg6: memref<16x256xf32, #tpu.memory_space<vmem>>, %arg7: memref<16x256xf32, #tpu.memory_space<vmem>>) attributes {dimension_semantics = [#tpu.dimension_semantics<parallel>, #tpu.dimension_semantics<parallel>, #tpu.dimension_semantics<arbitrary>], iteration_bounds = array<i64: 1, 1, 1>, scalar_prefetch = 0 : i64, scratch_operands = 1 : i64, tpu.core_type = #tpu.core_type<tc>, window_params = [{transform_indices = @transform_0, window_bounds = array<i64: 16, 32>}, {transform_indices = @transform_1, window_bounds = array<i64: 256, 32>}, {transform_indices = @transform_2, window_bounds = array<i64: 1, 256>}, {transform_indices = @transform_3, window_bounds = array<i64: 16, 256>}]} {
    %c0_i32 = arith.constant 0 : i32
    %0 = arith.cmpi eq, %arg2, %c0_i32 : i32
    %1 = arith.extui %0 : i1 to i32
    %c0_i32_0 = arith.constant 0 : i32
    %2 = arith.cmpi ne, %1, %c0_i32_0 : i32
    scf.if %2 {
      %cst_10 = arith.constant 0.000000e+00 : f32
      %12 = vector.broadcast %cst_10 : f32 to vector<16x256xf32>
      %c0_11 = arith.constant 0 : index
      %c0_12 = arith.constant 0 : index
      %13 = vector.load %arg7[%c0_11, %c0_12] : memref<16x256xf32, #tpu.memory_space<vmem>>, vector<16x256xf32>
      tpu.vector_store %arg7[%c0_11, %c0_12], %12 {strides = array<i32>} : memref<16x256xf32, #tpu.memory_space<vmem>>, vector<16x256xf32>,
    } else {
    }
    %c0 = arith.constant 0 : index
    %c0_1 = arith.constant 0 : index
    %3 = vector.load %arg3[%c0, %c0_1] : memref<16x32xf32, #tpu.memory_space<vmem>>, vector<16x32xf32>
    %c0_2 = arith.constant 0 : index
    %c0_3 = arith.constant 0 : index
    %4 = vector.load %arg4[%c0_2, %c0_3] : memref<256x32xf32, #tpu.memory_space<vmem>>, vector<256x32xf32>
    %c0_4 = arith.constant 0 : index
    %c0_5 = arith.constant 0 : index
    %5 = vector.load %arg7[%c0_4, %c0_5] : memref<16x256xf32, #tpu.memory_space<vmem>>, vector<16x256xf32>
    %cst = arith.constant dense<0.000000e+00> : vector<16x256xf32>
    %6 = tpu.matmul %3, %4, %cst {dimension_numbers = #tpu.dot_dimension_numbers<[1], [1], [0], [0], [0, 0, 1, 0], [], []>, precision = #tpu.contract_precision<fp32>} : vector<16x32xf32>, vector<256x32xf32>, vector<16x256xf32> -> vector<16x256xf32>
    %7 = arith.addf %5, %6 : vector<16x256xf32>
    %c0_6 = arith.constant 0 : index
    %c0_7 = arith.constant 0 : index
    %8 = vector.load %arg7[%c0_6, %c0_7] : memref<16x256xf32, #tpu.memory_space<vmem>>, vector<16x256xf32>
    tpu.vector_store %arg7[%c0_6, %c0_7], %7 {strides = array<i32>} : memref<16x256xf32, #tpu.memory_space<vmem>>, vector<16x256xf32>,
    %c0_i32_8 = arith.constant 0 : i32
    %9 = arith.cmpi eq, %arg2, %c0_i32_8 : i32
    %10 = arith.extui %9 : i1 to i32
    %c0_i32_9 = arith.constant 0 : i32
    %11 = arith.cmpi ne, %10, %c0_i32_9 : i32
    scf.if %11 {
      %c0_10 = arith.constant 0 : index
      %c0_11 = arith.constant 0 : index
      %12 = vector.load %arg7[%c0_10, %c0_11] : memref<16x256xf32, #tpu.memory_space<vmem>>, vector<16x256xf32>
      %c0_12 = arith.constant 0 : index
      %c0_13 = arith.constant 0 : index
      %13 = vector.load %arg5[%c0_12, %c0_13] : memref<1x256xf32, #tpu.memory_space<vmem>>, vector<1x256xf32>
      %14 = vector.broadcast %13 : vector<1x256xf32> to vector<16x256xf32>
      %15 = arith.mulf %12, %14 : vector<16x256xf32>
      %c0_14 = arith.constant 0 : index
      %c0_15 = arith.constant 0 : index
      %16 = vector.load %arg6[%c0_14, %c0_15] : memref<16x256xf32, #tpu.memory_space<vmem>>, vector<16x256xf32>
      tpu.vector_store %arg6[%c0_14, %c0_15], %15 {strides = array<i32>} : memref<16x256xf32, #tpu.memory_space<vmem>>, vector<16x256xf32>,
    } else {
    }
    return
  }
  func.func @transform_0(%arg0: i32, %arg1: i32, %arg2: i32) -> (i32, i32) {
    %c0_i32 = arith.constant 0 : i32
    return %arg0, %arg2 : i32, i32
  }
  func.func @transform_1(%arg0: i32, %arg1: i32, %arg2: i32) -> (i32, i32) {
    %c0_i32 = arith.constant 0 : i32
    return %arg1, %arg2 : i32, i32
  }
  func.func @transform_2(%arg0: i32, %arg1: i32, %arg2: i32) -> (i32, i32) {
    %c0_i32 = arith.constant 0 : i32
    %c0_i32_0 = arith.constant 0 : i32
    return %c0_i32, %arg1 : i32, i32
  }
  func.func @transform_3(%arg0: i32, %arg1: i32, %arg2: i32) -> (i32, i32) {
    %c0_i32 = arith.constant 0 : i32
    return %arg0, %arg1 : i32, i32
  }
}

</mosaic_0001>

<llo_original>
// kernel: normhead_forward.1
$region0: #{normhead_forward.1}
  #allocation0 [shape = 'u32[]', space=smem, size = 0x4, offset = 0x4, fixed_abs, tag = 'smem constant byte address 0x4 - core index']
  #allocation1 [shape = 'u32[72,128]{1,0:T(1,128)}', space=vmem, size = 0x9000, scoped, tag = 'internal scratch']
  #allocation2 [shape = 'f32[16,256]{1,0:T(8,128)}', space=vmem, size = 0x4000, scoped, tag = 'scratch operand']
  %s0 = inlined_call_operand.vmem [shape: f32[16,32], index: 0, kind: input, shape index: {}]
  %s1 = inlined_call_operand.vmem [shape: f32[256,32], index: 1, kind: input, shape index: {}]
  %s2 = inlined_call_operand.vmem [shape: f32[1,256], index: 2, kind: input, shape index: {}]
  %s3 = inlined_call_operand.hbm [shape: f32[16,256], index: 3, kind: output, shape index: {}]
  %s4 = sld [smem:[#allocation0]]
  $region30: #{normhead_forward.1} parent=0
    _
  %s6 = ssub.s32 1, %s4
  %s7 = scalar_select 0, %s6, %s4
  $region1: #{normhead_forward.1} parent=0
    #allocation3 [shape = 'u8[16384]{0}', space=vmem, size = 0x4000, scoped, tag = 'output window, operand 0, single buffered']
    #allocation4 [shape = 's32[1]{0}', space=sflag, size = 0x4, scoped, tag = 'scoped memory for normhead_forward.1']
    %8 = vsyncpa [#allocation4], 0
    // Predicated region
    $region2: #{normhead_forward.1} parent=1 // pred_check
      _
    $region3: #{normhead_forward.1} parent=1 // pred_check_branch
      %10 = sbr.rel (0) target = $region5
    $region4: #{normhead_forward.1} parent=1 // pred_region
      _
    $region5: #{normhead_forward.1} parent=1 // pred_fallthru
      _
    // Predicated region
    $region6: #{normhead_forward.1} parent=1 // pred_check
      _
    $region7: #{normhead_forward.1} parent=1 // pred_check_branch
      %12 = sbr.rel (0) target = $region9
    $region8: #{normhead_forward.1} parent=1 // pred_region
      _
    $region9: #{normhead_forward.1} parent=1 // pred_fallthru
      _
    // Predicated region
    $region10: #{normhead_forward.1} parent=1 // pred_check
      _
    $region11: #{normhead_forward.1} parent=1 // pred_check_branch
      %14 = sbr.rel (0) target = $region13
    $region12: #{normhead_forward.1} parent=1 // pred_region
      _
    $region13: #{normhead_forward.1} parent=1 // pred_fallthru
      _
    %p15 = scmp.eq.s32.totalorder 0, 0
    // Predicated region
    $region14: #{normhead_forward.1} parent=1 // pred_check
      %p16 = pneg %p15
    $region15: #{normhead_forward.1} parent=1 // pred_check_branch
      %18 = sbr.rel (%p16) target = $region17
    $region16: #{normhead_forward.1} parent=1 // pred_region
      %19 = vst [vmem:[#allocation2] sm:$0xff] 0.0
      %20 = vst [vmem:[#allocation2 + $0x8] sm:$0xff] 0.0
      %21 = vst [vmem:[#allocation2 + $0x10] sm:$0xff] 0.0
      %22 = vst [vmem:[#allocation2 + $0x18] sm:$0xff] 0.0
    $region17: #{normhead_forward.1} parent=1 // pred_fallthru
      _
    %v23 = vld [vmem:[%s0] sm:$0xff]
    %v24 = vld [vmem:[%s0 + $0x8] sm:$0xff]
    %v25 = vld [vmem:[%s1] sm:$0xff]
    %v26 = vld [vmem:[%s1 + $0x8] sm:$0xff]
    %v27 = vld [vmem:[%s1 + $0x10] sm:$0xff]
    %v28 = vld [vmem:[%s1 + $0x18] sm:$0xff]
    %v29 = vld [vmem:[%s1 + $0x20] sm:$0xff]
    %v30 = vld [vmem:[%s1 + $0x28] sm:$0xff]
    %v31 = vld [vmem:[%s1 + $0x30] sm:$0xff]
    %v32 = vld [vmem:[%s1 + $0x38] sm:$0xff]
    %v33 = vld [vmem:[%s1 + $0x40] sm:$0xff]
    %v34 = vld [vmem:[%s1 + $0x48] sm:$0xff]
    %v35 = vld [vmem:[%s1 + $0x50] sm:$0xff]
    %v36 = vld [vmem:[%s1 + $0x58] sm:$0xff]
    %v37 = vld [vmem:[%s1 + $0x60] sm:$0xff]
    %v38 = vld [vmem:[%s1 + $0x68] sm:$0xff]
    %v39 = vld [vmem:[%s1 + $0x70] sm:$0xff]
    %v40 = vld [vmem:[%s1 + $0x78] sm:$0xff]
    %v41 = vld [vmem:[%s1 + $0x80] sm:$0xff]
    %v42 = vld [vmem:[%s1 + $0x88] sm:$0xff]
    %v43 = vld [vmem:[%s1 + $0x90] sm:$0xff]
    %v44 = vld [vmem:[%s1 + $0x98] sm:$0xff]
    %v45 = vld [vmem:[%s1 + $0xa0] sm:$0xff]
    %v46 = vld [vmem:[%s1 + $0xa8] sm:$0xff]
    %v47 = vld [vmem:[%s1 + $0xb0] sm:$0xff]
    %v48 = vld [vmem:[%s1 + $0xb8] sm:$0xff]
    %v49 = vld [vmem:[%s1 + $0xc0] sm:$0xff]
    %v50 = vld [vmem:[%s1 + $0xc8] sm:$0xff]
    %v51 = vld [vmem:[%s1 + $0xd0] sm:$0xff]
    %v52 = vld [vmem:[%s1 + $0xd8] sm:$0xff]
    %v53 = vld [vmem:[%s1 + $0xe0] sm:$0xff]
    %v54 = vld [vmem:[%s1 + $0xe8] sm:$0xff]
    %v55 = vld [vmem:[%s1 + $0xf0] sm:$0xff]
    %v56 = vld [vmem:[%s1 + $0xf8] sm:$0xff]
    %v57 = vld [vmem:[#allocation2] sm:$0xff]
    %v58 = vld [vmem:[#allocation2 + $0x8] sm:$0xff]
    %v59 = vld [vmem:[#allocation2 + $0x10] sm:$0xff]
    %v60 = vld [vmem:[#allocation2 + $0x18] sm:$0xff]
    %vm61 = vcmask 261120
    %v63 = vsel %vm61, %v23, 0
    %v66 = vsel %vm61, %v24, 0
    %v69 = vsel %vm61, %v25, 0
    %v72 = vsel %vm61, %v26, 0
    %v75 = vsel %vm61, %v27, 0
    %v78 = vsel %vm61, %v28, 0
    %v81 = vsel %vm61, %v29, 0
    %v84 = vsel %vm61, %v30, 0
    %v87 = vsel %vm61, %v31, 0
    %v90 = vsel %vm61, %v32, 0
    %v93 = vsel %vm61, %v33, 0
    %v96 = vsel %vm61, %v34, 0
    %v99 = vsel %vm61, %v35, 0
    %v102 = vsel %vm61, %v36, 0
    %v105 = vsel %vm61, %v37, 0
    %v108 = vsel %vm61, %v38, 0
    %v111 = vsel %vm61, %v39, 0
    %v114 = vsel %vm61, %v40, 0
    %v117 = vsel %vm61, %v41, 0
    %v120 = vsel %vm61, %v42, 0
    %v123 = vsel %vm61, %v43, 0
    %v126 = vsel %vm61, %v44, 0
    %v129 = vsel %vm61, %v45, 0
    %v132 = vsel %vm61, %v46, 0
    %v135 = vsel %vm61, %v47, 0
    %v138 = vsel %vm61, %v48, 0
    %v141 = vsel %vm61, %v49, 0
    %v144 = vsel %vm61, %v50, 0
    %v147 = vsel %vm61, %v51, 0
    %v150 = vsel %vm61, %v52, 0
    %v153 = vsel %vm61, %v53, 0
    %v156 = vsel %vm61, %v54, 0
    %v159 = vsel %vm61, %v55, 0
    %v162 = vsel %vm61, %v56, 0
    %v164 = vand.u32 %v114, 4294901760
    %165 = vmatpush.xpose.msra.mxu0 %v164
    %v166 = vand.u32 %v111, 4294901760
    %167 = vmatpush.xpose.msra.mxu0 %v166
    %v168 = vand.u32 %v108, 4294901760
    %169 = vmatpush.xpose.msra.mxu0 %v168
    %v170 = vand.u32 %v105, 4294901760
    %171 = vmatpush.xpose.msra.mxu0 %v170
    %v172 = vand.u32 %v102, 4294901760
    %173 = vmatpush.xpose.msra.mxu0 %v172
    %v174 = vand.u32 %v99, 4294901760
    %175 = vmatpush.xpose.msra.mxu0 %v174
    %v176 = vand.u32 %v96, 4294901760
    %177 = vmatpush.xpose.msra.mxu0 %v176
    %v178 = vand.u32 %v93, 4294901760
    %179 = vmatpush.xpose.msra.mxu0 %v178
    %v180 = vand.u32 %v90, 4294901760
    %181 = vmatpush.xpose.msra.mxu0 %v180
    %v182 = vand.u32 %v87, 4294901760
    %183 = vmatpush.xpose.msra.mxu0 %v182
    %v184 = vand.u32 %v84, 4294901760
    %185 = vmatpush.xpose.msra.mxu0 %v184
    %v186 = vand.u32 %v81, 4294901760
    %187 = vmatpush.xpose.msra.mxu0 %v186
    %v188 = vand.u32 %v78, 4294901760
    %189 = vmatpush.xpose.msra.mxu0 %v188
    %v190 = vand.u32 %v75, 4294901760
    %191 = vmatpush.xpose.msra.mxu0 %v190
    %v192 = vand.u32 %v72, 4294901760
    %193 = vmatpush.xpose.msra.mxu0 %v192
    %v194 = vand.u32 %v69, 4294901760
    %195 = vmatpush.xpose.msra.mxu0 %v194
    %v196 = vand.u32 %v63, 4294901760
    %v197 = vsub.f32 %v63, %v196
    %v198 = vand.u32 %v197, 4294901760
    %v199 = vsub.f32 %v197, %v198
    %v200 = vand.u32 %v199, 4294901760
    %201 = vmatmul.f32.gmra.mxu0 %v200
    %v202 = vpop.f32.mrf.mxu0
    %v203 = vadd.f32 0.0, %v202
    %v204 = vand.u32 %v66, 4294901760
    %v205 = vsub.f32 %v66, %v204
    %v206 = vand.u32 %v205, 4294901760
    %v207 = vsub.f32 %v205, %v206
    %v208 = vand.u32 %v207, 4294901760
    %209 = vmatmul.f32.gmra.mxu0 %v208
    %v210 = vpop.f32.mrf.mxu0
    %v211 = vadd.f32 0.0, %v210
    %212 = vdwg.mxu0
    %v213 = vand.u32 %v114, 4294901760
    %v214 = vsub.f32 %v114, %v213
    %v215 = vand.u32 %v214, 4294901760
    %v216 = vsub.f32 %v214, %v215
    %v217 = vand.u32 %v216, 4294901760
    %218 = vmatpush.xpose.msra.mxu0 %v217
    %v219 = vand.u32 %v111, 4294901760
    %v220 = vsub.f32 %v111, %v219
    %v221 = vand.u32 %v220, 4294901760
    %v222 = vsub.f32 %v220, %v221
    %v223 = vand.u32 %v222, 4294901760
    %224 = vmatpush.xpose.msra.mxu0 %v223
    %v225 = vand.u32 %v108, 4294901760
    %v226 = vsub.f32 %v108, %v225
    %v227 = vand.u32 %v226, 4294901760
    %v228 = vsub.f32 %v226, %v227
    %v229 = vand.u32 %v228, 4294901760
    %230 = vmatpush.xpose.msra.mxu0 %v229
    %v231 = vand.u32 %v105, 4294901760
    %v232 = vsub.f32 %v105, %v231
    %v233 = vand.u32 %v232, 4294901760
    %v234 = vsub.f32 %v232, %v233
    %v235 = vand.u32 %v234, 4294901760
    %236 = vmatpush.xpose.msra.mxu0 %v235
    %v237 = vand.u32 %v102, 4294901760
    %v238 = vsub.f32 %v102, %v237
    %v239 = vand.u32 %v238, 4294901760
    %v240 = vsub.f32 %v238, %v239
    %v241 = vand.u32 %v240, 4294901760
    %242 = vmatpush.xpose.msra.mxu0 %v241
    %v243 = vand.u32 %v99, 4294901760
    %v244 = vsub.f32 %v99, %v243
    %v245 = vand.u32 %v244, 4294901760
    %v246 = vsub.f32 %v244, %v245
    %v247 = vand.u32 %v246, 4294901760
    %248 = vmatpush.xpose.msra.mxu0 %v247
    %v249 = vand.u32 %v96, 4294901760
    %v250 = vsub.f32 %v96, %v249
    %v251 = vand.u32 %v250, 4294901760
    %v252 = vsub.f32 %v250, %v251
    %v253 = vand.u32 %v252, 4294901760
    %254 = vmatpush.xpose.msra.mxu0 %v253
    %v255 = vand.u32 %v93, 4294901760
    %v256 = vsub.f32 %v93, %v255
    %v257 = vand.u32 %v256, 4294901760
    %v258 = vsub.f32 %v256, %v257
    %v259 = vand.u32 %v258, 4294901760
    %260 = vmatpush.xpose.msra.mxu0 %v259
    %v261 = vand.u32 %v90, 4294901760
    %v262 = vsub.f32 %v90, %v261
    %v263 = vand.u32 %v262, 4294901760
    %v264 = vsub.f32 %v262, %v263
    %v265 = vand.u32 %v264, 4294901760
    %266 = vmatpush.xpose.msra.mxu0 %v265
    %v267 = vand.u32 %v87, 4294901760
    %v268 = vsub.f32 %v87, %v267
    %v269 = vand.u32 %v268, 4294901760
    %v270 = vsub.f32 %v268, %v269
    %v271 = vand.u32 %v270, 4294901760
    %272 = vmatpush.xpose.msra.mxu0 %v271
    %v273 = vand.u32 %v84, 4294901760
    %v274 = vsub.f32 %v84, %v273
    %v275 = vand.u32 %v274, 4294901760
    %v276 = vsub.f32 %v274, %v275
    %v277 = vand.u32 %v276, 4294901760
    %278 = vmatpush.xpose.msra.mxu0 %v277
    %v279 = vand.u32 %v81, 4294901760
    %v280 = vsub.f32 %v81, %v279
    %v281 = vand.u32 %v280, 4294901760
    %v282 = vsub.f32 %v280, %v281
    %v283 = vand.u32 %v282, 4294901760
    %284 = vmatpush.xpose.msra.mxu0 %v283
    %v285 = vand.u32 %v78, 4294901760
    %v286 = vsub.f32 %v78, %v285
    %v287 = vand.u32 %v286, 4294901760
    %v288 = vsub.f32 %v286, %v287
    %v289 = vand.u32 %v288, 4294901760
    %290 = vmatpush.xpose.msra.mxu0 %v289
    %v291 = vand.u32 %v75, 4294901760
    %v292 = vsub.f32 %v75, %v291
    %v293 = vand.u32 %v292, 4294901760
    %v294 = vsub.f32 %v292, %v293
    %v295 = vand.u32 %v294, 4294901760
    %296 = vmatpush.xpose.msra.mxu0 %v295
    %v297 = vand.u32 %v72, 4294901760
    %v298 = vsub.f32 %v72, %v297
    %v299 = vand.u32 %v298, 4294901760
    %v300 = vsub.f32 %v298, %v299
    %v301 = vand.u32 %v300, 4294901760
    %302 = vmatpush.xpose.msra.mxu0 %v301
    %v303 = vand.u32 %v69, 4294901760
    %v304 = vsub.f32 %v69, %v303
    %v305 = vand.u32 %v304, 4294901760
    %v306 = vsub.f32 %v304, %v305
    %v307 = vand.u32 %v306, 4294901760
    %308 = vmatpush.xpose.msra.mxu0 %v307
    %v309 = vand.u32 %v63, 4294901760
    %310 = vmatmul.f32.gmra.mxu0 %v309
    %v311 = vpop.f32.mrf.mxu0
    %v312 = vadd.f32 %v203, %v311
    %v313 = vand.u32 %v66, 4294901760
    %314 = vmatmul.f32.gmra.mxu0 %v313
    %v315 = vpop.f32.mrf.mxu0
    %v316 = vadd.f32 %v211, %v315
    %317 = vdwg.mxu0
    %v318 = vand.u32 %v114, 4294901760
    %v319 = vsub.f32 %v114, %v318
    %320 = vmatpush.xpose.msra.mxu0 %v319
    %v321 = vand.u32 %v111, 4294901760
    %v322 = vsub.f32 %v111, %v321
    %323 = vmatpush.xpose.msra.mxu0 %v322
    %v324 = vand.u32 %v108, 4294901760
    %v325 = vsub.f32 %v108, %v324
    %326 = vmatpush.xpose.msra.mxu0 %v325
    %v327 = vand.u32 %v105, 4294901760
    %v328 = vsub.f32 %v105, %v327
    %329 = vmatpush.xpose.msra.mxu0 %v328
    %v330 = vand.u32 %v102, 4294901760
    %v331 = vsub.f32 %v102, %v330
    %332 = vmatpush.xpose.msra.mxu0 %v331
    %v333 = vand.u32 %v99, 4294901760
    %v334 = vsub.f32 %v99, %v333
    %335 = vmatpush.xpose.msra.mxu0 %v334
    %v336 = vand.u32 %v96, 4294901760
    %v337 = vsub.f32 %v96, %v336
    %338 = vmatpush.xpose.msra.mxu0 %v337
    %v339 = vand.u32 %v93, 4294901760
    %v340 = vsub.f32 %v93, %v339
    %341 = vmatpush.xpose.msra.mxu0 %v340
    %v342 = vand.u32 %v90, 4294901760
    %v343 = vsub.f32 %v90, %v342
    %344 = vmatpush.xpose.msra.mxu0 %v343
    %v345 = vand.u32 %v87, 4294901760
    %v346 = vsub.f32 %v87, %v345
    %347 = vmatpush.xpose.msra.mxu0 %v346
    %v348 = vand.u32 %v84, 4294901760
    %v349 = vsub.f32 %v84, %v348
    %350 = vmatpush.xpose.msra.mxu0 %v349
    %v351 = vand.u32 %v81, 4294901760
    %v352 = vsub.f32 %v81, %v351
    %353 = vmatpush.xpose.msra.mxu0 %v352
    %v354 = vand.u32 %v78, 4294901760
    %v355 = vsub.f32 %v78, %v354
    %356 = vmatpush.xpose.msra.mxu0 %v355
    %v357 = vand.u32 %v75, 4294901760
    %v358 = vsub.f32 %v75, %v357
    %359 = vmatpush.xpose.msra.mxu0 %v358
    %v360 = vand.u32 %v72, 4294901760
    %v361 = vsub.f32 %v72, %v360
    %362 = vmatpush.xpose.msra.mxu0 %v361
    %v363 = vand.u32 %v69, 4294901760
    %v364 = vsub.f32 %v69, %v363
    %365 = vmatpush.xpose.msra.mxu0 %v364
    %v366 = vand.u32 %v63, 4294901760
    %v367 = vsub.f32 %v63, %v366
    %368 = vmatmul.f32.gmra.mxu0 %v367
    %v369 = vpop.f32.mrf.mxu0
    %v370 = vadd.f32 %v312, %v369
    %v371 = vand.u32 %v66, 4294901760
    %v372 = vsub.f32 %v66, %v371
    %373 = vmatmul.f32.gmra.mxu0 %v372
    %v374 = vpop.f32.mrf.mxu0
    %v375 = vadd.f32 %v316, %v374
    %376 = vdwg.mxu0
    %v377 = vand.u32 %v114, 4294901760
    %378 = vmatpush.xpose.msra.mxu0 %v377
    %v379 = vand.u32 %v111, 4294901760
    %380 = vmatpush.xpose.msra.mxu0 %v379
    %v381 = vand.u32 %v108, 4294901760
    %382 = vmatpush.xpose.msra.mxu0 %v381
    %v383 = vand.u32 %v105, 4294901760
    %384 = vmatpush.xpose.msra.mxu0 %v383
    %v385 = vand.u32 %v102, 4294901760
    %386 = vmatpush.xpose.msra.mxu0 %v385
    %v387 = vand.u32 %v99, 4294901760
    %388 = vmatpush.xpose.msra.mxu0 %v387
    %v389 = vand.u32 %v96, 4294901760
    %390 = vmatpush.xpose.msra.mxu0 %v389
    %v391 = vand.u32 %v93, 4294901760
    %392 = vmatpush.xpose.msra.mxu0 %v391
    %v393 = vand.u32 %v90, 4294901760
    %394 = vmatpush.xpose.msra.mxu0 %v393
    %v395 = vand.u32 %v87, 4294901760
    %396 = vmatpush.xpose.msra.mxu0 %v395
    %v397 = vand.u32 %v84, 4294901760
    %398 = vmatpush.xpose.msra.mxu0 %v397
    %v399 = vand.u32 %v81, 4294901760
    %400 = vmatpush.xpose.msra.mxu0 %v399
    %v401 = vand.u32 %v78, 4294901760
    %402 = vmatpush.xpose.msra.mxu0 %v401
    %v403 = vand.u32 %v75, 4294901760
    %404 = vmatpush.xpose.msra.mxu0 %v403
    %v405 = vand.u32 %v72, 4294901760
    %406 = vmatpush.xpose.msra.mxu0 %v405
    %v407 = vand.u32 %v69, 4294901760
    %408 = vmatpush.xpose.msra.mxu0 %v407
    %v409 = vand.u32 %v63, 4294901760
    %v410 = vsub.f32 %v63, %v409
    %v411 = vand.u32 %v410, 4294901760
    %412 = vmatmul.f32.gmra.mxu0 %v411
    %v413 = vpop.f32.mrf.mxu0
    %v414 = vadd.f32 %v370, %v413
    %v415 = vand.u32 %v66, 4294901760
    %v416 = vsub.f32 %v66, %v415
    %v417 = vand.u32 %v416, 4294901760
    %418 = vmatmul.f32.gmra.mxu0 %v417
    %v419 = vpop.f32.mrf.mxu0
    %v420 = vadd.f32 %v375, %v419
    %421 = vdwg.mxu0
    %v422 = vand.u32 %v114, 4294901760
    %v423 = vsub.f32 %v114, %v422
    %v424 = vand.u32 %v423, 4294901760
    %425 = vmatpush.xpose.msra.mxu0 %v424
    %v426 = vand.u32 %v111, 4294901760
    %v427 = vsub.f32 %v111, %v426
    %v428 = vand.u32 %v427, 4294901760
    %429 = vmatpush.xpose.msra.mxu0 %v428
    %v430 = vand.u32 %v108, 4294901760
    %v431 = vsub.f32 %v108, %v430
    %v432 = vand.u32 %v431, 4294901760
    %433 = vmatpush.xpose.msra.mxu0 %v432
    %v434 = vand.u32 %v105, 4294901760
    %v435 = vsub.f32 %v105, %v434
    %v436 = vand.u32 %v435, 4294901760
    %437 = vmatpush.xpose.msra.mxu0 %v436
    %v438 = vand.u32 %v102, 4294901760
    %v439 = vsub.f32 %v102, %v438
    %v440 = vand.u32 %v439, 4294901760
    %441 = vmatpush.xpose.msra.mxu0 %v440
    %v442 = vand.u32 %v99, 4294901760
    %v443 = vsub.f32 %v99, %v442
    %v444 = vand.u32 %v443, 4294901760
    %445 = vmatpush.xpose.msra.mxu0 %v444
    %v446 = vand.u32 %v96, 4294901760
    %v447 = vsub.f32 %v96, %v446
    %v448 = vand.u32 %v447, 4294901760
    %449 = vmatpush.xpose.msra.mxu0 %v448
    %v450 = vand.u32 %v93, 4294901760
    %v451 = vsub.f32 %v93, %v450
    %v452 = vand.u32 %v451, 4294901760
    %453 = vmatpush.xpose.msra.mxu0 %v452
    %v454 = vand.u32 %v90, 4294901760
    %v455 = vsub.f32 %v90, %v454
    %v456 = vand.u32 %v455, 4294901760
    %457 = vmatpush.xpose.msra.mxu0 %v456
    %v458 = vand.u32 %v87, 4294901760
    %v459 = vsub.f32 %v87, %v458
    %v460 = vand.u32 %v459, 4294901760
    %461 = vmatpush.xpose.msra.mxu0 %v460
    %v462 = vand.u32 %v84, 4294901760
    %v463 = vsub.f32 %v84, %v462
    %v464 = vand.u32 %v463, 4294901760
    %465 = vmatpush.xpose.msra.mxu0 %v464
    %v466 = vand.u32 %v81, 4294901760
    %v467 = vsub.f32 %v81, %v466
    %v468 = vand.u32 %v467, 4294901760
    %469 = vmatpush.xpose.msra.mxu0 %v468
    %v470 = vand.u32 %v78, 4294901760
    %v471 = vsub.f32 %v78, %v470
    %v472 = vand.u32 %v471, 4294901760
    %473 = vmatpush.xpose.msra.mxu0 %v472
    %v474 = vand.u32 %v75, 4294901760
    %v475 = vsub.f32 %v75, %v474
    %v476 = vand.u32 %v475, 4294901760
    %477 = vmatpush.xpose.msra.mxu0 %v476
    %v478 = vand.u32 %v72, 4294901760
    %v479 = vsub.f32 %v72, %v478
    %v480 = vand.u32 %v479, 4294901760
    %481 = vmatpush.xpose.msra.mxu0 %v480
    %v482 = vand.u32 %v69, 4294901760
    %v483 = vsub.f32 %v69, %v482
    %v484 = vand.u32 %v483, 4294901760
    %485 = vmatpush.xpose.msra.mxu0 %v484
    %v486 = vand.u32 %v63, 4294901760
    %487 = vmatmul.f32.gmra.mxu0 %v486
    %v488 = vpop.f32.mrf.mxu0
    %v489 = vadd.f32 %v414, %v488
    %v490 = vand.u32 %v66, 4294901760
    %491 = vmatmul.f32.gmra.mxu0 %v490
    %v492 = vpop.f32.mrf.mxu0
    %v493 = vadd.f32 %v420, %v492
    %494 = vdwg.mxu0
    %v495 = vand.u32 %v114, 4294901760
    %496 = vmatpush.xpose.msra.mxu0 %v495
    %v497 = vand.u32 %v111, 4294901760
    %498 = vmatpush.xpose.msra.mxu0 %v497
    %v499 = vand.u32 %v108, 4294901760
    %500 = vmatpush.xpose.msra.mxu0 %v499
    %v501 = vand.u32 %v105, 4294901760
    %502 = vmatpush.xpose.msra.mxu0 %v501
    %v503 = vand.u32 %v102, 4294901760
    %504 = vmatpush.xpose.msra.mxu0 %v503
    %v505 = vand.u32 %v99, 4294901760
    %506 = vmatpush.xpose.msra.mxu0 %v505
    %v507 = vand.u32 %v96, 4294901760
    %508 = vmatpush.xpose.msra.mxu0 %v507
    %v509 = vand.u32 %v93, 4294901760
    %510 = vmatpush.xpose.msra.mxu0 %v509
    %v511 = vand.u32 %v90, 4294901760
    %512 = vmatpush.xpose.msra.mxu0 %v511
    %v513 = vand.u32 %v87, 4294901760
    %514 = vmatpush.xpose.msra.mxu0 %v513
    %v515 = vand.u32 %v84, 4294901760
    %516 = vmatpush.xpose.msra.mxu0 %v515
    %v517 = vand.u32 %v81, 4294901760
    %518 = vmatpush.xpose.msra.mxu0 %v517
    %v519 = vand.u32 %v78, 4294901760
    %520 = vmatpush.xpose.msra.mxu0 %v519
    %v521 = vand.u32 %v75, 4294901760
    %522 = vmatpush.xpose.msra.mxu0 %v521
    %v523 = vand.u32 %v72, 4294901760
    %524 = vmatpush.xpose.msra.mxu0 %v523
    %v525 = vand.u32 %v69, 4294901760
    %526 = vmatpush.xpose.msra.mxu0 %v525
    %v527 = vand.u32 %v63, 4294901760
    %528 = vmatmul.f32.gmra.mxu0 %v527
    %v529 = vpop.f32.mrf.mxu0
    %v530 = vadd.f32 %v489, %v529
    %v531 = vand.u32 %v66, 4294901760
    %532 = vmatmul.f32.gmra.mxu0 %v531
    %v533 = vpop.f32.mrf.mxu0
    %v534 = vadd.f32 %v493, %v533
    %535 = vdwg.mxu0
    %v536 = vand.u32 %v162, 4294901760
    %537 = vmatpush.xpose.msra.mxu0 %v536
    %v538 = vand.u32 %v159, 4294901760
    %539 = vmatpush.xpose.msra.mxu0 %v538
    %v540 = vand.u32 %v156, 4294901760
    %541 = vmatpush.xpose.msra.mxu0 %v540
    %v542 = vand.u32 %v153, 4294901760
    %543 = vmatpush.xpose.msra.mxu0 %v542
    %v544 = vand.u32 %v150, 4294901760
    %545 = vmatpush.xpose.msra.mxu0 %v544
    %v546 = vand.u32 %v147, 4294901760
    %547 = vmatpush.xpose.msra.mxu0 %v546
    %v548 = vand.u32 %v144, 4294901760
    %549 = vmatpush.xpose.msra.mxu0 %v548
    %v550 = vand.u32 %v141, 4294901760
    %551 = vmatpush.xpose.msra.mxu0 %v550
    %v552 = vand.u32 %v138, 4294901760
    %553 = vmatpush.xpose.msra.mxu0 %v552
    %v554 = vand.u32 %v135, 4294901760
    %555 = vmatpush.xpose.msra.mxu0 %v554
    %v556 = vand.u32 %v132, 4294901760
    %557 = vmatpush.xpose.msra.mxu0 %v556
    %v558 = vand.u32 %v129, 4294901760
    %559 = vmatpush.xpose.msra.mxu0 %v558
    %v560 = vand.u32 %v126, 4294901760
    %561 = vmatpush.xpose.msra.mxu0 %v560
    %v562 = vand.u32 %v123, 4294901760
    %563 = vmatpush.xpose.msra.mxu0 %v562
    %v564 = vand.u32 %v120, 4294901760
    %565 = vmatpush.xpose.msra.mxu0 %v564
    %v566 = vand.u32 %v117, 4294901760
    %567 = vmatpush.xpose.msra.mxu0 %v566
    %v568 = vand.u32 %v63, 4294901760
    %v569 = vsub.f32 %v63, %v568
    %v570 = vand.u32 %v569, 4294901760
    %v571 = vsub.f32 %v569, %v570
    %v572 = vand.u32 %v571, 4294901760
    %573 = vmatmul.f32.gmra.mxu0 %v572
    %v574 = vpop.f32.mrf.mxu0
    %v575 = vadd.f32 0.0, %v574
    %v576 = vand.u32 %v66, 4294901760
    %v577 = vsub.f32 %v66, %v576
    %v578 = vand.u32 %v577, 4294901760
    %v579 = vsub.f32 %v577, %v578
    %v580 = vand.u32 %v579, 4294901760
    %581 = vmatmul.f32.gmra.mxu0 %v580
    %v582 = vpop.f32.mrf.mxu0
    %v583 = vadd.f32 0.0, %v582
    %584 = vdwg.mxu0
    %v585 = vand.u32 %v162, 4294901760
    %v586 = vsub.f32 %v162, %v585
    %v587 = vand.u32 %v586, 4294901760
    %v588 = vsub.f32 %v586, %v587
    %v589 = vand.u32 %v588, 4294901760
    %590 = vmatpush.xpose.msra.mxu0 %v589
    %v591 = vand.u32 %v159, 4294901760
    %v592 = vsub.f32 %v159, %v591
    %v593 = vand.u32 %v592, 4294901760
    %v594 = vsub.f32 %v592, %v593
    %v595 = vand.u32 %v594, 4294901760
    %596 = vmatpush.xpose.msra.mxu0 %v595
    %v597 = vand.u32 %v156, 4294901760
    %v598 = vsub.f32 %v156, %v597
    %v599 = vand.u32 %v598, 4294901760
    %v600 = vsub.f32 %v598, %v599
    %v601 = vand.u32 %v600, 4294901760
    %602 = vmatpush.xpose.msra.mxu0 %v601
    %v603 = vand.u32 %v153, 4294901760
    %v604 = vsub.f32 %v153, %v603
    %v605 = vand.u32 %v604, 4294901760
    %v606 = vsub.f32 %v604, %v605
    %v607 = vand.u32 %v606, 4294901760
    %608 = vmatpush.xpose.msra.mxu0 %v607
    %v609 = vand.u32 %v150, 4294901760
    %v610 = vsub.f32 %v150, %v609
    %v611 = vand.u32 %v610, 4294901760
    %v612 = vsub.f32 %v610, %v611
    %v613 = vand.u32 %v612, 4294901760
    %614 = vmatpush.xpose.msra.mxu0 %v613
    %v615 = vand.u32 %v147, 4294901760
    %v616 = vsub.f32 %v147, %v615
    %v617 = vand.u32 %v616, 4294901760
    %v618 = vsub.f32 %v616, %v617
    %v619 = vand.u32 %v618, 4294901760
    %620 = vmatpush.xpose.msra.mxu0 %v619
    %v621 = vand.u32 %v144, 4294901760
    %v622 = vsub.f32 %v144, %v621
    %v623 = vand.u32 %v622, 4294901760
    %v624 = vsub.f32 %v622, %v623
    %v625 = vand.u32 %v624, 4294901760
    %626 = vmatpush.xpose.msra.mxu0 %v625
    %v627 = vand.u32 %v141, 4294901760
    %v628 = vsub.f32 %v141, %v627
    %v629 = vand.u32 %v628, 4294901760
    %v630 = vsub.f32 %v628, %v629
    %v631 = vand.u32 %v630, 4294901760
    %632 = vmatpush.xpose.msra.mxu0 %v631
    %v633 = vand.u32 %v138, 4294901760
    %v634 = vsub.f32 %v138, %v633
    %v635 = vand.u32 %v634, 4294901760
    %v636 = vsub.f32 %v634, %v635
    %v637 = vand.u32 %v636, 4294901760
    %638 = vmatpush.xpose.msra.mxu0 %v637
    %v639 = vand.u32 %v135, 4294901760
    %v640 = vsub.f32 %v135, %v639
    %v641 = vand.u32 %v640, 4294901760
    %v642 = vsub.f32 %v640, %v641
    %v643 = vand.u32 %v642, 4294901760
    %644 = vmatpush.xpose.msra.mxu0 %v643
    %v645 = vand.u32 %v132, 4294901760
    %v646 = vsub.f32 %v132, %v645
    %v647 = vand.u32 %v646, 4294901760
    %v648 = vsub.f32 %v646, %v647
    %v649 = vand.u32 %v648, 4294901760
    %650 = vmatpush.xpose.msra.mxu0 %v649
    %v651 = vand.u32 %v129, 4294901760
    %v652 = vsub.f32 %v129, %v651
    %v653 = vand.u32 %v652, 4294901760
    %v654 = vsub.f32 %v652, %v653
    %v655 = vand.u32 %v654, 4294901760
    %656 = vmatpush.xpose.msra.mxu0 %v655
    %v657 = vand.u32 %v126, 4294901760
    %v658 = vsub.f32 %v126, %v657
    %v659 = vand.u32 %v658, 4294901760
    %v660 = vsub.f32 %v658, %v659
    %v661 = vand.u32 %v660, 4294901760
    %662 = vmatpush.xpose.msra.mxu0 %v661
    %v663 = vand.u32 %v123, 4294901760
    %v664 = vsub.f32 %v123, %v663
    %v665 = vand.u32 %v664, 4294901760
    %v666 = vsub.f32 %v664, %v665
    %v667 = vand.u32 %v666, 4294901760
    %668 = vmatpush.xpose.msra.mxu0 %v667
    %v669 = vand.u32 %v120, 4294901760
    %v670 = vsub.f32 %v120, %v669
    %v671 = vand.u32 %v670, 4294901760
    %v672 = vsub.f32 %v670, %v671
    %v673 = vand.u32 %v672, 4294901760
    %674 = vmatpush.xpose.msra.mxu0 %v673
    %v675 = vand.u32 %v117, 4294901760
    %v676 = vsub.f32 %v117, %v675
    %v677 = vand.u32 %v676, 4294901760
    %v678 = vsub.f32 %v676, %v677
    %v679 = vand.u32 %v678, 4294901760
    %680 = vmatpush.xpose.msra.mxu0 %v679
    %v681 = vand.u32 %v63, 4294901760
    %682 = vmatmul.f32.gmra.mxu0 %v681
    %v683 = vpop.f32.mrf.mxu0
    %v684 = vadd.f32 %v575, %v683
    %v685 = vand.u32 %v66, 4294901760
    %686 = vmatmul.f32.gmra.mxu0 %v685
    %v687 = vpop.f32.mrf.mxu0
    %v688 = vadd.f32 %v583, %v687
    %689 = vdwg.mxu0
    %v690 = vand.u32 %v162, 4294901760
    %v691 = vsub.f32 %v162, %v690
    %692 = vmatpush.xpose.msra.mxu0 %v691
    %v693 = vand.u32 %v159, 4294901760
    %v694 = vsub.f32 %v159, %v693
    %695 = vmatpush.xpose.msra.mxu0 %v694
    %v696 = vand.u32 %v156, 4294901760
    %v697 = vsub.f32 %v156, %v696
    %698 = vmatpush.xpose.msra.mxu0 %v697
    %v699 = vand.u32 %v153, 4294901760
    %v700 = vsub.f32 %v153, %v699
    %701 = vmatpush.xpose.msra.mxu0 %v700
    %v702 = vand.u32 %v150, 4294901760
    %v703 = vsub.f32 %v150, %v702
    %704 = vmatpush.xpose.msra.mxu0 %v703
    %v705 = vand.u32 %v147, 4294901760
    %v706 = vsub.f32 %v147, %v705
    %707 = vmatpush.xpose.msra.mxu0 %v706
    %v708 = vand.u32 %v144, 4294901760
    %v709 = vsub.f32 %v144, %v708
    %710 = vmatpush.xpose.msra.mxu0 %v709
    %v711 = vand.u32 %v141, 4294901760
    %v712 = vsub.f32 %v141, %v711
    %713 = vmatpush.xpose.msra.mxu0 %v712
    %v714 = vand.u32 %v138, 4294901760
    %v715 = vsub.f32 %v138, %v714
    %716 = vmatpush.xpose.msra.mxu0 %v715
    %v717 = vand.u32 %v135, 4294901760
    %v718 = vsub.f32 %v135, %v717
    %719 = vmatpush.xpose.msra.mxu0 %v718
    %v720 = vand.u32 %v132, 4294901760
    %v721 = vsub.f32 %v132, %v720
    %722 = vmatpush.xpose.msra.mxu0 %v721
    %v723 = vand.u32 %v129, 4294901760
    %v724 = vsub.f32 %v129, %v723
    %725 = vmatpush.xpose.msra.mxu0 %v724
    %v726 = vand.u32 %v126, 4294901760
    %v727 = vsub.f32 %v126, %v726
    %728 = vmatpush.xpose.msra.mxu0 %v727
    %v729 = vand.u32 %v123, 4294901760
    %v730 = vsub.f32 %v123, %v729
    %731 = vmatpush.xpose.msra.mxu0 %v730
    %v732 = vand.u32 %v120, 4294901760
    %v733 = vsub.f32 %v120, %v732
    %734 = vmatpush.xpose.msra.mxu0 %v733
    %v735 = vand.u32 %v117, 4294901760
    %v736 = vsub.f32 %v117, %v735
    %737 = vmatpush.xpose.msra.mxu0 %v736
    %v738 = vand.u32 %v63, 4294901760
    %v739 = vsub.f32 %v63, %v738
    %740 = vmatmul.f32.gmra.mxu0 %v739
    %v741 = vpop.f32.mrf.mxu0
    %v742 = vadd.f32 %v684, %v741
    %v743 = vand.u32 %v66, 4294901760
    %v744 = vsub.f32 %v66, %v743
    %745 = vmatmul.f32.gmra.mxu0 %v744
    %v746 = vpop.f32.mrf.mxu0
    %v747 = vadd.f32 %v688, %v746
    %748 = vdwg.mxu0
    %v749 = vand.u32 %v162, 4294901760
    %750 = vmatpush.xpose.msra.mxu0 %v749
    %v751 = vand.u32 %v159, 4294901760
    %752 = vmatpush.xpose.msra.mxu0 %v751
    %v753 = vand.u32 %v156, 4294901760
    %754 = vmatpush.xpose.msra.mxu0 %v753
    %v755 = vand.u32 %v153, 4294901760
    %756 = vmatpush.xpose.msra.mxu0 %v755
    %v757 = vand.u32 %v150, 4294901760
    %758 = vmatpush.xpose.msra.mxu0 %v757
    %v759 = vand.u32 %v147, 4294901760
    %760 = vmatpush.xpose.msra.mxu0 %v759
    %v761 = vand.u32 %v144, 4294901760
    %762 = vmatpush.xpose.msra.mxu0 %v761
    %v763 = vand.u32 %v141, 4294901760
    %764 = vmatpush.xpose.msra.mxu0 %v763
    %v765 = vand.u32 %v138, 4294901760
    %766 = vmatpush.xpose.msra.mxu0 %v765
    %v767 = vand.u32 %v135, 4294901760
    %768 = vmatpush.xpose.msra.mxu0 %v767
    %v769 = vand.u32 %v132, 4294901760
    %770 = vmatpush.xpose.msra.mxu0 %v769
    %v771 = vand.u32 %v129, 4294901760
    %772 = vmatpush.xpose.msra.mxu0 %v771
    %v773 = vand.u32 %v126, 4294901760
    %774 = vmatpush.xpose.msra.mxu0 %v773
    %v775 = vand.u32 %v123, 4294901760
    %776 = vmatpush.xpose.msra.mxu0 %v775
    %v777 = vand.u32 %v120, 4294901760
    %778 = vmatpush.xpose.msra.mxu0 %v777
    %v779 = vand.u32 %v117, 4294901760
    %780 = vmatpush.xpose.msra.mxu0 %v779
    %v781 = vand.u32 %v63, 4294901760
    %v782 = vsub.f32 %v63, %v781
    %v783 = vand.u32 %v782, 4294901760
    %784 = vmatmul.f32.gmra.mxu0 %v783
    %v785 = vpop.f32.mrf.mxu0
    %v786 = vadd.f32 %v742, %v785
    %v787 = vand.u32 %v66, 4294901760
    %v788 = vsub.f32 %v66, %v787
    %v789 = vand.u32 %v788, 4294901760
    %790 = vmatmul.f32.gmra.mxu0 %v789
    %v791 = vpop.f32.mrf.mxu0
    %v792 = vadd.f32 %v747, %v791
    %793 = vdwg.mxu0
    %v794 = vand.u32 %v162, 4294901760
    %v795 = vsub.f32 %v162, %v794
    %v796 = vand.u32 %v795, 4294901760
    %797 = vmatpush.xpose.msra.mxu0 %v796
    %v798 = vand.u32 %v159, 4294901760
    %v799 = vsub.f32 %v159, %v798
    %v800 = vand.u32 %v799, 4294901760
    %801 = vmatpush.xpose.msra.mxu0 %v800
    %v802 = vand.u32 %v156, 4294901760
    %v803 = vsub.f32 %v156, %v802
    %v804 = vand.u32 %v803, 4294901760
    %805 = vmatpush.xpose.msra.mxu0 %v804
    %v806 = vand.u32 %v153, 4294901760
    %v807 = vsub.f32 %v153, %v806
    %v808 = vand.u32 %v807, 4294901760
    %809 = vmatpush.xpose.msra.mxu0 %v808
    %v810 = vand.u32 %v150, 4294901760
    %v811 = vsub.f32 %v150, %v810
    %v812 = vand.u32 %v811, 4294901760
    %813 = vmatpush.xpose.msra.mxu0 %v812
    %v814 = vand.u32 %v147, 4294901760
    %v815 = vsub.f32 %v147, %v814
    %v816 = vand.u32 %v815, 4294901760
    %817 = vmatpush.xpose.msra.mxu0 %v816
    %v818 = vand.u32 %v144, 4294901760
    %v819 = vsub.f32 %v144, %v818
    %v820 = vand.u32 %v819, 4294901760
    %821 = vmatpush.xpose.msra.mxu0 %v820
    %v822 = vand.u32 %v141, 4294901760
    %v823 = vsub.f32 %v141, %v822
    %v824 = vand.u32 %v823, 4294901760
    %825 = vmatpush.xpose.msra.mxu0 %v824
    %v826 = vand.u32 %v138, 4294901760
    %v827 = vsub.f32 %v138, %v826
    %v828 = vand.u32 %v827, 4294901760
    %829 = vmatpush.xpose.msra.mxu0 %v828
    %v830 = vand.u32 %v135, 4294901760
    %v831 = vsub.f32 %v135, %v830
    %v832 = vand.u32 %v831, 4294901760
    %833 = vmatpush.xpose.msra.mxu0 %v832
    %v834 = vand.u32 %v132, 4294901760
    %v835 = vsub.f32 %v132, %v834
    %v836 = vand.u32 %v835, 4294901760
    %837 = vmatpush.xpose.msra.mxu0 %v836
    %v838 = vand.u32 %v129, 4294901760
    %v839 = vsub.f32 %v129, %v838
    %v840 = vand.u32 %v839, 4294901760
    %841 = vmatpush.xpose.msra.mxu0 %v840
    %v842 = vand.u32 %v126, 4294901760
    %v843 = vsub.f32 %v126, %v842
    %v844 = vand.u32 %v843, 4294901760
    %845 = vmatpush.xpose.msra.mxu0 %v844
    %v846 = vand.u32 %v123, 4294901760
    %v847 = vsub.f32 %v123, %v846
    %v848 = vand.u32 %v847, 4294901760
    %849 = vmatpush.xpose.msra.mxu0 %v848
    %v850 = vand.u32 %v120, 4294901760
    %v851 = vsub.f32 %v120, %v850
    %v852 = vand.u32 %v851, 4294901760
    %853 = vmatpush.xpose.msra.mxu0 %v852
    %v854 = vand.u32 %v117, 4294901760
    %v855 = vsub.f32 %v117, %v854
    %v856 = vand.u32 %v855, 4294901760
    %857 = vmatpush.xpose.msra.mxu0 %v856
    %v858 = vand.u32 %v63, 4294901760
    %859 = vmatmul.f32.gmra.mxu0 %v858
    %v860 = vpop.f32.mrf.mxu0
    %v861 = vadd.f32 %v786, %v860
    %v862 = vand.u32 %v66, 4294901760
    %863 = vmatmul.f32.gmra.mxu0 %v862
    %v864 = vpop.f32.mrf.mxu0
    %v865 = vadd.f32 %v792, %v864
    %866 = vdwg.mxu0
    %v867 = vand.u32 %v162, 4294901760
    %868 = vmatpush.xpose.msra.mxu0 %v867
    %v869 = vand.u32 %v159, 4294901760
    %870 = vmatpush.xpose.msra.mxu0 %v869
    %v871 = vand.u32 %v156, 4294901760
    %872 = vmatpush.xpose.msra.mxu0 %v871
    %v873 = vand.u32 %v153, 4294901760
    %874 = vmatpush.xpose.msra.mxu0 %v873
    %v875 = vand.u32 %v150, 4294901760
    %876 = vmatpush.xpose.msra.mxu0 %v875
    %v877 = vand.u32 %v147, 4294901760
    %878 = vmatpush.xpose.msra.mxu0 %v877
    %v879 = vand.u32 %v144, 4294901760
    %880 = vmatpush.xpose.msra.mxu0 %v879
    %v881 = vand.u32 %v141, 4294901760
    %882 = vmatpush.xpose.msra.mxu0 %v881
    %v883 = vand.u32 %v138, 4294901760
    %884 = vmatpush.xpose.msra.mxu0 %v883
    %v885 = vand.u32 %v135, 4294901760
    %886 = vmatpush.xpose.msra.mxu0 %v885
    %v887 = vand.u32 %v132, 4294901760
    %888 = vmatpush.xpose.msra.mxu0 %v887
    %v889 = vand.u32 %v129, 4294901760
    %890 = vmatpush.xpose.msra.mxu0 %v889
    %v891 = vand.u32 %v126, 4294901760
    %892 = vmatpush.xpose.msra.mxu0 %v891
    %v893 = vand.u32 %v123, 4294901760
    %894 = vmatpush.xpose.msra.mxu0 %v893
    %v895 = vand.u32 %v120, 4294901760
    %896 = vmatpush.xpose.msra.mxu0 %v895
    %v897 = vand.u32 %v117, 4294901760
    %898 = vmatpush.xpose.msra.mxu0 %v897
    %v899 = vand.u32 %v63, 4294901760
    %900 = vmatmul.f32.gmra.mxu0 %v899
    %v901 = vpop.f32.mrf.mxu0
    %v902 = vadd.f32 %v861, %v901
    %v903 = vand.u32 %v66, 4294901760
    %904 = vmatmul.f32.gmra.mxu0 %v903
    %v905 = vpop.f32.mrf.mxu0
    %v906 = vadd.f32 %v865, %v905
    %907 = vdwg.mxu0
    %v908 = vadd.f32 %v57, %v530
    %v909 = vadd.f32 %v58, %v902
    %v910 = vadd.f32 %v59, %v534
    %v911 = vadd.f32 %v60, %v906
    %912 = vst [vmem:[#allocation2] sm:$0xff] %v908
    %913 = vst [vmem:[#allocation2 + $0x8] sm:$0xff] %v909
    %914 = vst [vmem:[#allocation2 + $0x10] sm:$0xff] %v910
    %915 = vst [vmem:[#allocation2 + $0x18] sm:$0xff] %v911
    // Predicated region
    $region18: #{normhead_forward.1} parent=1 // pred_check
      %p916 = pneg %p15
    $region19: #{normhead_forward.1} parent=1 // pred_check_branch
      %918 = sbr.rel (%p916) target = $region21
    $region20: #{normhead_forward.1} parent=1 // pred_region
      %v919 = vld [vmem:[#allocation2] sm:$0xff]
      %v920 = vld [vmem:[#allocation2 + $0x8] sm:$0xff]
      %v921 = vld [vmem:[#allocation2 + $0x10] sm:$0xff]
      %v922 = vld [vmem:[#allocation2 + $0x18] sm:$0xff]
      %v923 = vld [vmem:[%s2] sm:$0x3]
      %v925 = vperm.slane %v923, 0
      %v926 = vperm.slane %v923, 1
      %v929 = vmul.f32 %v919, %v925
      %v930 = vmul.f32 %v920, %v926
      %v931 = vmul.f32 %v921, %v925
      %v932 = vmul.f32 %v922, %v926
      %933 = vst [vmem:[#allocation3] sm:$0xff] %v929
      %934 = vst [vmem:[#allocation3 + $0x8] sm:$0xff] %v930
      %935 = vst [vmem:[#allocation3 + $0x10] sm:$0xff] %v931
      %936 = vst [vmem:[#allocation3 + $0x18] sm:$0xff] %v932
    $region21: #{normhead_forward.1} parent=1 // pred_fallthru
      _
    // Predicated region
    $region22: #{normhead_forward.1} parent=1 // pred_check
      _
    $region23: #{normhead_forward.1} parent=1 // pred_check_branch
      %938 = sbr.rel (0) target = $region25
    $region24: #{normhead_forward.1} parent=1 // pred_region
      %940 = vsyncadd [#allocation4], 0
      %s941 = sshll.u32 [#allocation3], 4
      %s942 = int_to_ptr.vmem [resolvable:$true] %s941
      %s943 = sshll.u32 %s3, 4
      %s944 = int_to_ptr.hbm [resolvable:$true] %s943
      %949 = dma.vmem_to_hbm [thread:$0]  %s942, 512, %s944, [#allocation4], 256, 256, 16
    $region25: #{normhead_forward.1} parent=1 // pred_fallthru
      _
    // Predicated region
    $region26: #{normhead_forward.1} parent=1 // pred_check
      _
    $region27: #{normhead_forward.1} parent=1 // pred_check_branch
      %951 = sbr.rel (0) target = $region29
    $region28: #{normhead_forward.1} parent=1 // pred_region
      %953 = dma.done [#allocation4], 512
    $region29: #{normhead_forward.1} parent=1 // pred_fallthru
      _
    %954 = vsyncpa [#allocation4], 1

</llo_original>
